<compile_context>
chip_gen: v6e
topology: v6e:2x2x1
jax: 0.10.0
libtpu: 0.0.40
codegen_flags: <defaults>
</compile_context>

<pallas_src>
import jax
import jax.numpy as jnp
from jax.experimental import pallas as pl
from jax.experimental.pallas import tpu as pltpu

GROUPS = 2

# ~6 MiB per block; 2 inputs buffers + 2 output buffers (double-buffered)
# => ~24 MiB resident, safe on v5e/v6e (128 MiB VMEM) and v7x (64 MiB/TC).
TARGET_BLOCK_BYTES = 6 << 20
VMEM_LIMIT_BYTES = 48 << 20


def _copy_kernel(x_ref, o_ref):
    # Both refs are (cpg_block, hw_block); the shuffle is done by DMA addressing.
    o_ref[...] = x_ref[...]


def _largest_divisor_multiple(total, align, cap):
    """Largest divisor of `total` that is a multiple of `align` and <= cap, or None."""
    best = None
    limit = min(total, cap)
    d = align
    while d <= limit:
        if total % d == 0:
            best = d
        d += align
    return best


def _pick_blocks(cpg, hw, itemsize, target_bytes):
    """Pick (cpg_block, hw_block) under a single combined byte budget."""
    sublane = max(8, 32 // itemsize)  # 8 for f32, 16 for bf16, 32 for int8
    # Channel-per-group block: prefer the full extent; split (sublane-aligned)
    # only when even a minimal 128-wide lane tile would blow the budget.
    if cpg <= sublane or cpg * 128 * itemsize <= target_bytes:
        cpg_block = cpg
    else:
        cap = max(sublane, target_bytes // (128 * itemsize))
        cpg_block = _largest_divisor_multiple(cpg, sublane, cap) or cpg
    # Lane (HW) block: largest 128-multiple divisor of hw within what's left.
    cap = max(128, target_bytes // (cpg_block * itemsize))
    hw_block = _largest_divisor_multiple(hw, 128, cap) or 128
    return cpg_block, hw_block


def channel_shuffle(x: jax.Array) -> jax.Array:
    """Pallas ChannelShuffle(groups=2). x is NCHW."""
    N, C, H, W = x.shape
    g = GROUPS
    assert C % g == 0, "channels must be divisible by groups"
    cpg = C // g
    HW = H * W
    itemsize = jnp.dtype(x.dtype).itemsize

    # ---- lane alignment: pad HW up to a multiple of 128 if needed ----------
    x3 = x.reshape(N, C, HW)
    pad = (-HW) % 128
    if pad:
        x3 = jnp.pad(x3, ((0, 0), (0, 0), (0, pad)))
    HW_p = HW + pad

    cpg_block, hw_block = _pick_blocks(cpg, HW_p, itemsize, TARGET_BLOCK_BYTES)
    n_cb = cpg // cpg_block
    n_hb = HW_p // hw_block

    cost = pl.CostEstimate(
        flops=0,
        transcendentals=0,
        bytes_accessed=2 * N * C * HW_p * itemsize,
    )

    # Input viewed as (N, g, cpg, HW_p):  x4[n, j, i, hw] = x[n, j*cpg + i, hw].
    x4 = x3.reshape(N, g, cpg, HW_p)

    # Output produced as (N, cpg, g*HW_p): out3[n, i, j*HW_p + hw] = y[n, i*g + j, hw].
    out3 = pl.pallas_call(
        _copy_kernel,
        out_shape=jax.ShapeDtypeStruct((N, cpg, g * HW_p), x.dtype),
        grid=(N, g, n_cb, n_hb),
        in_specs=[
            pl.BlockSpec(
                (pl.Squeezed(), pl.Squeezed(), cpg_block, hw_block),
                lambda n, j, ci, hi: (n, j, ci, hi),
            )
        ],
        out_specs=pl.BlockSpec(
            (pl.Squeezed(), cpg_block, hw_block),
            lambda n, j, ci, hi: (n, ci, j * n_hb + hi),
        ),
        compiler_params=pltpu.CompilerParams(
            dimension_semantics=("parallel", "parallel", "parallel", "parallel"),
            vmem_limit_bytes=VMEM_LIMIT_BYTES,
        ),
        cost_estimate=cost,
    )(x4)

    # (N, cpg, g*HW_p) -> (N, C, HW_p): the channel interleave falls out for free.
    out = out3.reshape(N, C, HW_p)
    if pad:
        out = out[:, :, :HW]
    return out.reshape(N, C, H, W)


def _reference(x: jax.Array) -> jax.Array:
    N, C, H, W = x.shape
    g = GROUPS
    return (
        x.reshape(N, g, C // g, H, W)
        .transpose(0, 2, 1, 3, 4)
        .reshape(N, C, H, W)
    )


if __name__ == "__main__":
    key = jax.random.PRNGKey(0)

    # Small NCHW input; C divisible by groups=2 (lane-aligned HW -> fast path).
    x = jax.random.normal(key, (2, 4, 16, 16), dtype=jnp.float32)
    y = jax.block_until_ready(channel_shuffle(x))
    if not jnp.array_equal(y, _reference(x)):
        raise AssertionError("Pallas ChannelShuffle mismatch vs reference (aligned HW)")

    # Non-128-aligned HW exercises the pad-and-slice path.
    key2 = jax.random.PRNGKey(0)
    x2 = jax.random.normal(key2, (2, 6, 5, 7), dtype=jnp.float32)
    y2 = jax.block_until_ready(channel_shuffle(x2))
    if not jnp.array_equal(y2, _reference(x2)):
        raise AssertionError("Pallas ChannelShuffle mismatch vs reference (padded HW)")

    print("KERNEL_OK")
</pallas_src>

<mosaic_0001>
module attributes {stable_mosaic.version = 11 : i64} {
  func.func @_copy_kernel(%arg0: i32, %arg1: i32, %arg2: i32, %arg3: i32, %arg4: memref<1x1x2x256xf32, #tpu.memory_space<vmem>>, %arg5: memref<1x2x256xf32, #tpu.memory_space<vmem>>) attributes {dimension_semantics = [#tpu.dimension_semantics<parallel>, #tpu.dimension_semantics<parallel>, #tpu.dimension_semantics<parallel>, #tpu.dimension_semantics<parallel>], iteration_bounds = array<i64: 2, 2, 1, 1>, scalar_prefetch = 0 : i64, scratch_operands = 0 : i64, tpu.core_type = #tpu.core_type<tc>, window_params = [{transform_indices = @transform_0, window_bounds = array<i64: 1, 1, 2, 256>}, {transform_indices = @transform_1, window_bounds = array<i64: 1, 2, 256>}]} {
    %c0 = arith.constant 0 : index
    %c0_0 = arith.constant 0 : index
    %c0_1 = arith.constant 0 : index
    %c0_2 = arith.constant 0 : index
    %0 = vector.load %arg4[%c0, %c0_0, %c0_1, %c0_2] : memref<1x1x2x256xf32, #tpu.memory_space<vmem>>, vector<1x1x2x256xf32>
    %1 = vector.shape_cast %0 : vector<1x1x2x256xf32> to vector<2x256xf32>
    %c0_3 = arith.constant 0 : index
    %c0_4 = arith.constant 0 : index
    %c0_5 = arith.constant 0 : index
    %2 = vector.load %arg5[%c0_3, %c0_4, %c0_5] : memref<1x2x256xf32, #tpu.memory_space<vmem>>, vector<1x2x256xf32>
    %3 = vector.shape_cast %2 : vector<1x2x256xf32> to vector<2x256xf32>
    %4 = vector.shape_cast %1 : vector<2x256xf32> to vector<1x2x256xf32>
    tpu.vector_store %arg5[%c0_3, %c0_4, %c0_5], %4 {strides = array<i32>} : memref<1x2x256xf32, #tpu.memory_space<vmem>>, vector<1x2x256xf32>,
    return
  }
  func.func @transform_0(%arg0: i32, %arg1: i32, %arg2: i32, %arg3: i32) -> (i32, i32, i32, i32) {
    %c0_i32 = arith.constant 0 : i32
    return %arg0, %arg1, %arg2, %arg3 : i32, i32, i32, i32
  }
  func.func @transform_1(%arg0: i32, %arg1: i32, %arg2: i32, %arg3: i32) -> (i32, i32, i32) {
    %c1_i32 = arith.constant 1 : i32
    %0 = arith.muli %arg1, %c1_i32 : i32
    %1 = arith.addi %0, %arg3 : i32
    %c0_i32 = arith.constant 0 : i32
    return %arg0, %arg2, %1 : i32, i32, i32
  }
}

</mosaic_0001>

<llo_original>
// kernel: tpu_custom_call.1
$region0: #{tpu_custom_call.1}
  #allocation0 [shape = 'u32[]', space=smem, size = 0x4, offset = 0x4, fixed_abs, tag = 'smem constant byte address 0x4 - core index']
  #allocation1 [shape = 'u32[144,128]{1,0:T(1,128)}', space=vmem, size = 0x12000, scoped, tag = 'internal scratch']
  %s0 = inlined_call_operand.hbm [shape: f32[2,2,2,256], index: 0, kind: input, shape index: {}]
  %s1 = inlined_call_operand.hbm [shape: f32[2,2,512], index: 1, kind: output, shape index: {}]
  %s2 = sld [smem:[#allocation0]]
  $region41: #{tpu_custom_call.1} parent=0
    _
  %s4 = ssub.s32 1, %s2
  %s5 = scalar_select 0, %s4, %s2
  $region1: #{tpu_custom_call.1} parent=0
    #allocation2 [shape = 'u8[4096]{0}', space=vmem, size = 0x1000, scoped, tag = 'input window, operand 0']
    #allocation3 [shape = 's32[2]{0}', space=sflag, size = 0x8, scoped, tag = 'scoped memory for tpu_custom_call.1']
    #allocation4 [shape = 's32[2]{0}', space=sflag, size = 0x8, scoped, tag = 'scoped memory for tpu_custom_call.1']
    #allocation5 [shape = 'u8[4096]{0}', space=vmem, size = 0x1000, scoped, tag = 'output window, operand 0']
    %6 = vsyncpa [#allocation3], 0
    %s7 = scalar_lea.sflag [#allocation3], 1
    %8 = vsyncpa %s7, 0
    %9 = vsyncpa [#allocation4], 0
    %s10 = scalar_lea.sflag [#allocation4], 1
    %11 = vsyncpa %s10, 0
    loop: start=0, step=1, limit=6
    $region2: #{tpu_custom_call.1} parent=1 // loop_pre_header
      _
    $region3: #{tpu_custom_call.1} parent=1 // loop_header
      %s13 = sphi 0, %s17
      %p14 = scmp.ge.s32.totalorder %s13, 6
      %s20 = sphi 0, %s46
      %s21 = sphi 0, %s42
      %s22 = sphi 0, %s38
      %s23 = sphi 0, %s34
      %s24 = sphi 0, %s20
      %s25 = sphi 0, %s21
      %s26 = sphi 0, %s22
      %s27 = sphi 0, %s23
      %s28 = sphi 0, %s24
      %s29 = sphi 0, %s25
      %s30 = sphi 0, %s26
      %s31 = sphi 0, %s27
      %s55 = sphi 0, %s57
      %s58 = sphi 0, %s55
      %s59 = sphi 0, %s58
      %s75 = sphi 0, %s59
      %s87 = sphi 0, %s89
      %s90 = sphi 0, %s87
      %s91 = sphi 0, %s90
      %s107 = sphi 0, %s91
    $region4: #{tpu_custom_call.1} parent=1 // loop_header_branch
      %16 = sbr.rel (%p14) target = $region8
    $region5: #{tpu_custom_call.1} parent=1 // loop_body
      %s18 = ssub.s32 %s13, 1
      %s19 = ssub.s32 %s13, 2
      %s32 = sadd.s32 1, %s23
      %p33 = scmp.ge.s32.totalorder %s32, 1
      %s34 = scalar_select %p33, 0, %s32
      %s35 = sadd.s32 1, %s22
      %s36 = scalar_select %p33, %s35, %s22
      %p37 = scmp.ge.s32.totalorder %s36, 1
      %s38 = scalar_select %p37, 0, %s36
      %s39 = sadd.s32 1, %s21
      %s40 = scalar_select %p37, %s39, %s21
      %p41 = scmp.ge.s32.totalorder %s40, 2
      %s42 = scalar_select %p41, 0, %s40
      %s43 = sadd.s32 1, %s20
      %s44 = scalar_select %p41, %s43, %s20
      %p45 = scmp.ge.s32.totalorder %s44, 2
      %s46 = scalar_select %p45, 0, %s44
      %s47 = ssub.s32 %s20, %s46
      %s48 = ssub.s32 %s21, %s42
      %s49 = sor.u32 %s47, %s48
      %s50 = ssub.s32 %s22, %s38
      %s51 = sor.u32 %s49, %s50
      %s52 = ssub.s32 %s23, %s34
      %s53 = sor.u32 %s51, %s52
      %p54 = scmp.eq.s32.totalorder %s53, 0
      %s56 = sadd.s32 %s55, 1
      %s57 = scalar_select %p54, %s55, %s56
      %p60 = pneg %p54
      %p61 = scmp.eq.s32.totalorder %s13, 3
      %p62 = por %p60, %p61
      %p63 = scmp.ne.s32.totalorder %s55, %s58
      %p64 = scmp.eq.s32.totalorder %s13, 0
      %p65 = por %p63, %p64
      %p66 = scmp.ne.s32.totalorder %s55, %s58
      %p67 = scmp.eq.s32.totalorder %s18, 3
      %p68 = por %p66, %p67
      %p69 = scmp.ne.s32.totalorder %s58, %s59
      %p70 = scmp.eq.s32.totalorder %s18, 0
      %p71 = por %p69, %p70
      %p72 = scmp.ne.s32.totalorder %s58, %s59
      %p73 = scmp.eq.s32.totalorder %s19, 3
      %p74 = por %p72, %p73
      %p76 = scmp.ne.s32.totalorder %s59, %s75
      %p77 = scmp.eq.s32.totalorder %s19, 0
      %p78 = por %p76, %p77
      %s79 = sadd.s32 %s21, %s23
      %s80 = sadd.s32 %s42, %s34
      %s81 = ssub.s32 %s20, %s46
      %s82 = ssub.s32 %s22, %s38
      %s83 = sor.u32 %s81, %s82
      %s84 = ssub.s32 %s79, %s80
      %s85 = sor.u32 %s83, %s84
      %p86 = scmp.eq.s32.totalorder %s85, 0
      %s88 = sadd.s32 %s87, 1
      %s89 = scalar_select %p86, %s87, %s88
      %p92 = pneg %p86
      %p93 = scmp.eq.s32.totalorder %s13, 3
      %p94 = por %p92, %p93
      %p95 = scmp.ne.s32.totalorder %s87, %s90
      %p96 = scmp.eq.s32.totalorder %s13, 0
      %p97 = por %p95, %p96
      %p98 = scmp.ne.s32.totalorder %s87, %s90
      %p99 = scmp.eq.s32.totalorder %s18, 3
      %p100 = por %p98, %p99
      %p101 = scmp.ne.s32.totalorder %s90, %s91
      %p102 = scmp.eq.s32.totalorder %s18, 0
      %p103 = por %p101, %p102
      %p104 = scmp.ne.s32.totalorder %s90, %s91
      %p105 = scmp.eq.s32.totalorder %s19, 3
      %p106 = por %p104, %p105
      %p108 = scmp.ne.s32.totalorder %s91, %s107
      %p109 = scmp.eq.s32.totalorder %s19, 0
      %p110 = por %p108, %p109
      %p111 = scmp.le.s32.totalorder 1, %s13
      %p112 = scmp.lt.s32.totalorder %s13, 5
      %p113 = pnand %p111, %p112
      %p114 = pneg %p113
      // Predicated region
      $region9: #{tpu_custom_call.1} parent=5 // pred_check
        _
      $region10: #{tpu_custom_call.1} parent=5 // pred_check_branch
        %116 = sbr.rel (%p113) target = $region12
      $region11: #{tpu_custom_call.1} parent=5 // pred_region
        %s117 = ssub.s32 %s13, 1
      $region12: #{tpu_custom_call.1} parent=5 // pred_fallthru
        _
      %p118 = scmp.lt.s32.totalorder %s13, 4
      // Predicated region
      $region13: #{tpu_custom_call.1} parent=5 // pred_check
        %p119 = pneg %p118
      $region14: #{tpu_custom_call.1} parent=5 // pred_check_branch
        %121 = sbr.rel (%p119) target = $region16
      $region15: #{tpu_custom_call.1} parent=5 // pred_region
        // Predicated region
        $region17: #{tpu_custom_call.1} parent=15 // pred_check
          %p122 = pneg %p65
        $region18: #{tpu_custom_call.1} parent=15 // pred_check_branch
          %124 = sbr.rel (%p122) target = $region20
        $region19: #{tpu_custom_call.1} parent=15 // pred_region
          %s125 = sand.u32 %s55, 1
          %s126 = scalar_lea.sflag [#allocation3], %s125
          %s127 = sand.u32 %s55, 1
          %s128 = smul.addr %s127, 4
          %s129 = scalar_lea.vmem [#allocation2], %s128
          %s130 = smul.u32 2, %s23
          %s132 = ssub.s32 64, 64
          %133 = vsyncadd %s126, %s132
          %s134 = smul.addr %s22, 2
          %s135 = sadd.s32 %s130, %s134
          %s136 = smul.addr %s21, 2
          %s137 = sadd.s32 %s135, %s136
          %s138 = smul.addr %s20, 4
          %s139 = sadd.s32 %s137, %s138
          %s140 = smul.addr %s139, 32
          %s141 = scalar_lea.hbm %s0, %s140
          %s143 = sshll.u32 %s129, 4
          %s144 = int_to_ptr.vmem [resolvable:$true] %s143
          %146 = dma.hbm_to_vmem [thread:$0]  %s141, 64, %s144, %s126
        $region20: #{tpu_custom_call.1} parent=15 // pred_fallthru
          _
      $region16: #{tpu_custom_call.1} parent=5 // pred_fallthru
        _
      %p147 = scmp.le.s32.totalorder 1, %s13
      %p148 = scmp.lt.s32.totalorder %s13, 5
      %p149 = pnand %p147, %p148
      %p150 = pneg %p149
      // Predicated region
      $region21: #{tpu_custom_call.1} parent=5 // pred_check
        _
      $region22: #{tpu_custom_call.1} parent=5 // pred_check_branch
        %152 = sbr.rel (%p149) target = $region24
      $region23: #{tpu_custom_call.1} parent=5 // pred_region
        %s153 = ssub.s32 %s13, 1
        %s154 = sand.u32 %s58, 1
        %s155 = scalar_lea.sflag [#allocation3], %s154
        %s156 = sand.u32 %s58, 1
        %s157 = smul.addr %s156, 4
        %s158 = scalar_lea.vmem [#allocation2], %s157
        // Predicated region
        $region25: #{tpu_custom_call.1} parent=23 // pred_check
          %p159 = pneg %p71
        $region26: #{tpu_custom_call.1} parent=23 // pred_check_branch
          %161 = sbr.rel (%p159) target = $region28
        $region27: #{tpu_custom_call.1} parent=23 // pred_region
          %162 = dma.done %s155, 64
        $region28: #{tpu_custom_call.1} parent=23 // pred_fallthru
          _
        %s163 = sand.u32 %s58, 1
        %s164 = scalar_lea.sflag [#allocation3], %s163
        %s165 = sand.u32 %s58, 1
        %s166 = smul.addr %s165, 4
        %s167 = scalar_lea.vmem [#allocation2], %s166
        %p168 = pneg %p71
        %p169 = pneg %p68
        %p170 = pneg %p103
        %p171 = pneg %p100
        %s172 = sand.u32 %s90, 1
        %s173 = scalar_lea.sflag [#allocation4], %s172
        %s174 = sand.u32 %s90, 1
        %s175 = smul.addr %s174, 4
        %s176 = scalar_lea.vmem [#allocation5], %s175
        %s177 = smul.u32 2, %s27
        %s178 = sadd.s32 %s25, %s27
        %s179 = smul.u32 2, %s178
        %v180 = vld [vmem:[%s158] sm:$0xf]
        %181 = vst [vmem:[%s176] sm:$0xf] %v180
        %s182 = sand.u32 %s90, 1
        %s183 = scalar_lea.sflag [#allocation4], %s182
        %s184 = sand.u32 %s90, 1
        %s185 = smul.addr %s184, 4
        %s186 = scalar_lea.vmem [#allocation5], %s185
        // Predicated region
        $region29: #{tpu_custom_call.1} parent=23 // pred_check
          %p187 = pneg %p100
        $region30: #{tpu_custom_call.1} parent=23 // pred_check_branch
          %189 = sbr.rel (%p187) target = $region32
        $region31: #{tpu_custom_call.1} parent=23 // pred_region
          %s190 = sadd.s32 %s25, %s27
          %s191 = smul.u32 2, %s190
          %s193 = ssub.s32 64, 64
          %194 = vsyncadd %s183, %s193
          %s195 = smul.addr %s26, 4
          %s196 = sadd.s32 %s191, %s195
          %s197 = smul.addr %s24, 4
          %s198 = sadd.s32 %s196, %s197
          %s199 = smul.addr %s198, 32
          %s200 = scalar_lea.hbm %s1, %s199
          %s202 = sshll.u32 %s186, 4
          %s203 = int_to_ptr.vmem [resolvable:$true] %s202
          %205 = dma.vmem_to_hbm [thread:$0]  %s203, 64, %s200, %s183
        $region32: #{tpu_custom_call.1} parent=23 // pred_fallthru
          _
      $region24: #{tpu_custom_call.1} parent=5 // pred_fallthru
        _
      %p206 = scmp.le.s32.totalorder 2, %s13
      // Predicated region
      $region33: #{tpu_custom_call.1} parent=5 // pred_check
        %p207 = pneg %p206
      $region34: #{tpu_custom_call.1} parent=5 // pred_check_branch
        %209 = sbr.rel (%p207) target = $region36
      $region35: #{tpu_custom_call.1} parent=5 // pred_region
        %s210 = ssub.s32 %s13, 2
        // Predicated region
        $region37: #{tpu_custom_call.1} parent=35 // pred_check
          %p211 = pneg %p106
        $region38: #{tpu_custom_call.1} parent=35 // pred_check_branch
          %213 = sbr.rel (%p211) target = $region40
        $region39: #{tpu_custom_call.1} parent=35 // pred_region
          %s214 = sand.u32 %s91, 1
          %s215 = scalar_lea.sflag [#allocation4], %s214
          %s216 = sand.u32 %s91, 1
          %s217 = smul.addr %s216, 4
          %s218 = scalar_lea.vmem [#allocation5], %s217
          %219 = dma.done %s215, 64
        $region40: #{tpu_custom_call.1} parent=35 // pred_fallthru
          _
      $region36: #{tpu_custom_call.1} parent=5 // pred_fallthru
        _
    $region6: #{tpu_custom_call.1} parent=1 // loop_footer
      %s17 = sadd.s32 1, %s13
    $region7: #{tpu_custom_call.1} parent=1 // loop_footer_branch
      %12 = sbr.rel target = $region3
    $region8: #{tpu_custom_call.1} parent=1 // loop_exit
      _
    %220 = vsyncpa [#allocation3], 1
    %s221 = scalar_lea.sflag [#allocation3], 1
    %222 = vsyncpa %s221, 1
    %223 = vsyncpa [#allocation4], 1
    %s224 = scalar_lea.sflag [#allocation4], 1
    %225 = vsyncpa %s224, 1

</llo_original>
